<compile_context>
chip_gen: v6e
topology: v6e:2x2x1
jax: 0.10.0
libtpu: 0.0.40
codegen_flags: <defaults>
</compile_context>

<pallas_src>
import jax
import jax.numpy as jnp
from jax.experimental import pallas as pl
from jax.experimental.pallas import tpu as pltpu

_LANE = 128
_MAX_LANE_WIDTH = 8192                   # widest logical lane slab we try
_TARGET_BLOCK_BYTES = 2 * 1024 * 1024    # ~2 MiB blocks (85%+ of HBM roofline)


def _swish_kernel(x_ref, o_ref):
    x = x_ref[...]
    # swish(x) = x * sigmoid(x), in the input's native dtype.
    # exp() and the reciprocal both map to the EUP slot; exact (approx=False)
    # reciprocal keeps full precision and is free in this HBM-bound regime.
    sig = pl.reciprocal(1.0 + jnp.exp(-x), approx=False)
    o_ref[...] = (x * sig).astype(o_ref.dtype)


def _choose_layout(n: int, itemsize: int):
    """Pick (lane_width, rows, row_tile, padded_rows) for a flat length n."""
    # Lane width: largest power-of-two multiple of 128 (<= 8192) dividing n,
    # so stores are lane-dense/unmasked and no tail padding is needed.
    lane_width = _LANE
    cand = _MAX_LANE_WIDTH
    while cand >= _LANE:
        if n % cand == 0:
            lane_width = cand
            break
        cand //= 2

    rows = pl.cdiv(n, lane_width)
    max_rows = max(1, _TARGET_BLOCK_BYTES // (lane_width * itemsize))

    if rows <= max_rows:
        row_tile = rows  # single full-extent block along rows
    else:
        t = max(8, (max_rows // 8) * 8)
        # Prefer a row tile (multiple of 8) that divides `rows` exactly so we
        # never pad, as long as it stays within ~2x of the target block size.
        row_tile = t
        for c in range(t, max(8, t // 2) - 1, -8):
            if rows % c == 0:
                row_tile = c
                break

    padded_rows = pl.cdiv(rows, row_tile) * row_tile
    return lane_width, rows, row_tile, padded_rows


def swish(x: jax.Array) -> jax.Array:
    """Elementwise Swish: x * sigmoid(x). Same shape/dtype as input."""
    orig_shape = x.shape
    dtype = x.dtype
    n = x.size
    if n == 0:
        return x

    itemsize = jnp.dtype(dtype).itemsize
    lane_width, rows, row_tile, padded_rows = _choose_layout(n, itemsize)
    n_pad = padded_rows * lane_width

    x_flat = x.reshape(-1)
    if n_pad != n:
        # Gated pad: zero padding is safe (swish(0) == 0) and this path only
        # triggers for sizes that are not multiples of 128 (or with a hostile
        # row count).  Typical NCHW activations take the no-pad path.
        x_flat = jnp.pad(x_flat, (0, n_pad - n))
    x2d = x_flat.reshape(padded_rows, lane_width)

    grid = (padded_rows // row_tile,)
    out2d = pl.pallas_call(
        _swish_kernel,
        out_shape=jax.ShapeDtypeStruct((padded_rows, lane_width), dtype),
        grid_spec=pltpu.PrefetchScalarGridSpec(
            num_scalar_prefetch=0,
            grid=grid,
            in_specs=[pl.BlockSpec((row_tile, lane_width), lambda i: (i, 0))],
            out_specs=pl.BlockSpec((row_tile, lane_width), lambda i: (i, 0)),
        ),
        compiler_params=pltpu.CompilerParams(
            # "parallel" lets v7x shard grid steps across its 2 TensorCores.
            dimension_semantics=("parallel",),
            # 2 MiB blocks x (in + out) x double buffering = ~8 MiB; 32 MiB is
            # comfortable headroom and valid on every generation (v7x scoped
            # default is 32 MiB, v5e/v6e physical VMEM is 128 MiB).
            vmem_limit_bytes=32 * 1024 * 1024,
        ),
        cost_estimate=pl.CostEstimate(
            flops=3 * n_pad,
            transcendentals=n_pad,
            bytes_accessed=2 * n_pad * itemsize,
        ),
    )(x2d)

    if n_pad != n:
        return out2d.reshape(-1)[:n].reshape(orig_shape)
    return out2d.reshape(orig_shape)


if __name__ == "__main__":
    key = jax.random.PRNGKey(0)
    # NCHW input, as a PyTorch conv-style activation would see.
    x = jax.random.normal(key, (2, 4, 16, 16), dtype=jnp.float32)

    y = swish(x)
    jax.block_until_ready(y)

    # Reference check against plain JAX swish.
    y_ref = x * jax.nn.sigmoid(x)
    assert y.shape == x.shape and y.dtype == x.dtype
    assert jnp.max(jnp.abs(y - y_ref)) < 1e-5

    print("KERNEL_OK")
</pallas_src>

<mosaic_0001>
module attributes {stable_mosaic.version = 11 : i64} {
  func.func @_swish_kernel(%arg0: i32, %arg1: memref<1x2048xf32, #tpu.memory_space<vmem>>, %arg2: memref<1x2048xf32, #tpu.memory_space<vmem>>) attributes {dimension_semantics = [#tpu.dimension_semantics<parallel>], iteration_bounds = array<i64: 1>, scalar_prefetch = 0 : i64, scratch_operands = 0 : i64, tpu.core_type = #tpu.core_type<tc>, window_params = [{transform_indices = @transform_0, window_bounds = array<i64: 1, 2048>}, {transform_indices = @transform_1, window_bounds = array<i64: 1, 2048>}]} {
    %c0 = arith.constant 0 : index
    %c0_0 = arith.constant 0 : index
    %0 = vector.load %arg1[%c0, %c0_0] : memref<1x2048xf32, #tpu.memory_space<vmem>>, vector<1x2048xf32>
    %cst = arith.constant 0.000000e+00 : f32
    %1 = vector.broadcast %cst : f32 to vector<1x2048xf32>
    %2 = arith.subf %1, %0 : vector<1x2048xf32>
    %3 = math.exp %2 : vector<1x2048xf32>
    %cst_1 = arith.constant 1.000000e+00 : f32
    %4 = vector.broadcast %cst_1 : f32 to vector<1x2048xf32>
    %5 = arith.addf %4, %3 : vector<1x2048xf32>
    %6 = tpu.reciprocal %5 : vector<1x2048xf32> -> vector<1x2048xf32>
    %7 = arith.mulf %0, %6 : vector<1x2048xf32>
    %c0_2 = arith.constant 0 : index
    %c0_3 = arith.constant 0 : index
    %8 = vector.load %arg2[%c0_2, %c0_3] : memref<1x2048xf32, #tpu.memory_space<vmem>>, vector<1x2048xf32>
    tpu.vector_store %arg2[%c0_2, %c0_3], %7 {strides = array<i32>} : memref<1x2048xf32, #tpu.memory_space<vmem>>, vector<1x2048xf32>,
    return
  }
  func.func @transform_0(%arg0: i32) -> (i32, i32) {
    %c0_i32 = arith.constant 0 : i32
    %c0_i32_0 = arith.constant 0 : i32
    return %arg0, %c0_i32 : i32, i32
  }
  func.func @transform_1(%arg0: i32) -> (i32, i32) {
    %c0_i32 = arith.constant 0 : i32
    %c0_i32_0 = arith.constant 0 : i32
    return %arg0, %c0_i32 : i32, i32
  }
}

</mosaic_0001>

<llo_original>
// kernel: tpu_custom_call.1
$region0: #{tpu_custom_call.1}
  #allocation0 [shape = 'u32[]', space=smem, size = 0x4, offset = 0x4, fixed_abs, tag = 'smem constant byte address 0x4 - core index']
  #allocation1 [shape = 'u32[144,128]{1,0:T(1,128)}', space=vmem, size = 0x12000, scoped, tag = 'internal scratch']
  %s0 = inlined_call_operand.hbm [shape: f32[1,2048], index: 0, kind: input, shape index: {}]
  %s1 = inlined_call_operand.hbm [shape: f32[1,2048], index: 1, kind: output, shape index: {}]
  %s2 = sld [smem:[#allocation0]]
  $region18: #{tpu_custom_call.1} parent=0
    _
  %s4 = ssub.s32 1, %s2
  %s5 = scalar_select 0, %s4, %s2
  $region1: #{tpu_custom_call.1} parent=0
    #allocation2 [shape = 'u8[8192]{0}', space=vmem, size = 0x2000, scoped, tag = 'input window, operand 0, single buffered']
    #allocation3 [shape = 's32[1]{0}', space=sflag, size = 0x4, scoped, tag = 'scoped memory for tpu_custom_call.1']
    #allocation4 [shape = 's32[1]{0}', space=sflag, size = 0x4, scoped, tag = 'scoped memory for tpu_custom_call.1']
    #allocation5 [shape = 'u8[8192]{0}', space=vmem, size = 0x2000, scoped, tag = 'output window, operand 0, single buffered']
    %6 = vsyncpa [#allocation3], 0
    %7 = vsyncpa [#allocation4], 0
    // Predicated region
    $region2: #{tpu_custom_call.1} parent=1 // pred_check
      _
    $region3: #{tpu_custom_call.1} parent=1 // pred_check_branch
      %9 = sbr.rel (0) target = $region5
    $region4: #{tpu_custom_call.1} parent=1 // pred_region
      %s11 = ssub.s32 256, 256
      %12 = vsyncadd [#allocation3], %s11
      %s14 = sshll.u32 [#allocation2], 4
      %s15 = int_to_ptr.vmem [resolvable:$true] %s14
      %17 = dma.hbm_to_vmem [thread:$0]  %s0, 256, %s15, [#allocation3]
    $region5: #{tpu_custom_call.1} parent=1 // pred_fallthru
      _
    // Predicated region
    $region6: #{tpu_custom_call.1} parent=1 // pred_check
      _
    $region7: #{tpu_custom_call.1} parent=1 // pred_check_branch
      %19 = sbr.rel (0) target = $region9
    $region8: #{tpu_custom_call.1} parent=1 // pred_region
      %20 = dma.done [#allocation3], 256
    $region9: #{tpu_custom_call.1} parent=1 // pred_fallthru
      _
    %v21 = vld [vmem:[#allocation2] sm:$0xff]
    %v22 = vld [vmem:[#allocation2 + $0x8] sm:$0xff]
    %v23 = vsub.f32 0.0, %v21
    %v24 = vsub.f32 0.0, %v22
    %v25 = vmul.f32 %v23, 1.442695
    %v26 = vpow.pop %v25
    %v27 = vmul.f32 %v24, 1.442695
    %v28 = vpow.pop %v27
    %v29 = vadd.f32 %v26, 1.0
    %v30 = vadd.f32 %v28, 1.0
    %v31 = vrcp.pop %v29
    %v32 = vrcp.pop %v30
    %v33 = vmul.f32 %v21, %v31
    %v34 = vmul.f32 %v22, %v32
    %35 = vst [vmem:[#allocation5] sm:$0xff] %v33
    %36 = vst [vmem:[#allocation5 + $0x8] sm:$0xff] %v34
    // Predicated region
    $region10: #{tpu_custom_call.1} parent=1 // pred_check
      _
    $region11: #{tpu_custom_call.1} parent=1 // pred_check_branch
      %38 = sbr.rel (0) target = $region13
    $region12: #{tpu_custom_call.1} parent=1 // pred_region
      %s40 = ssub.s32 256, 256
      %41 = vsyncadd [#allocation4], %s40
      %s43 = sshll.u32 [#allocation5], 4
      %s44 = int_to_ptr.vmem [resolvable:$true] %s43
      %46 = dma.vmem_to_hbm [thread:$0]  %s44, 256, %s1, [#allocation4]
    $region13: #{tpu_custom_call.1} parent=1 // pred_fallthru
      _
    // Predicated region
    $region14: #{tpu_custom_call.1} parent=1 // pred_check
      _
    $region15: #{tpu_custom_call.1} parent=1 // pred_check_branch
      %48 = sbr.rel (0) target = $region17
    $region16: #{tpu_custom_call.1} parent=1 // pred_region
      %49 = dma.done [#allocation4], 256
    $region17: #{tpu_custom_call.1} parent=1 // pred_fallthru
      _
    %50 = vsyncpa [#allocation3], 1
    %51 = vsyncpa [#allocation4], 1

</llo_original>
